<compile_context>
chip_gen: v7x
topology: tpu7x:2x2x1
jax: 0.10.0
libtpu: 0.0.40
codegen_flags: <defaults>
</compile_context>

<pallas_src>
import functools

import jax
import jax.numpy as jnp
from jax.experimental import pallas as pl
from jax.experimental.pallas import tpu as pltpu


def _round_up(v, m):
    return ((v + m - 1) // m) * m


def _log_softmax_kernel(x_ref, o_ref, *, valid_l):
    # Block: (TILE_R, L_PAD). Reduction (log-sum-exp) runs over the lane axis.
    x = x_ref[...]
    if x.dtype != jnp.float32:  # only upcast narrow dtypes (bf16/fp8); f32 stays as-is
        x = x.astype(jnp.float32)
    if valid_l != x.shape[-1]:
        # Lanes beyond the real L are block-padding garbage: mask to -inf so they
        # contribute exp(-inf)=0 to the sum and never win the max.
        lane = jax.lax.broadcasted_iota(jnp.int32, x.shape, dimension=1)
        x = jnp.where(lane < valid_l, x, -jnp.inf)
    m = jnp.max(x, axis=-1, keepdims=True)
    s = x - m
    lse = jnp.log(jnp.sum(jnp.exp(s), axis=-1, keepdims=True))
    o_ref[...] = (s - lse).astype(o_ref.dtype)


def softmax_log_probability_1d(x, *, max_block_bytes=2 << 20, max_tile_rows=1024):
    """x: (N, C, L) -> log_softmax over L, shape (N, C, L). Matches the PyTorch module."""
    N, C, L = x.shape
    R = N * C
    x2 = x.reshape(R, L)

    itemsize = jnp.dtype(x.dtype).itemsize
    l_pad = _round_up(L, 128)  # lane-dense block width (multiple of 128)

    # Row tile: multiple of 8, as large as the block-byte budget allows (capped so the
    # pipeline's double-buffered in+out + f32 temps stays far below VMEM on all gens).
    rows = max_block_bytes // (l_pad * itemsize)
    rows = max(8, (rows // 8) * 8)
    rows = min(rows, max_tile_rows)
    tile_r = min(rows, _round_up(R, 8))

    grid = (pl.cdiv(R, tile_r),)

    kernel = functools.partial(_log_softmax_kernel, valid_l=L)

    cost = pl.CostEstimate(
        flops=3 * R * L,                    # subtract max, subtract lse, sum
        transcendentals=R * L + R,          # exp per element + log per row
        bytes_accessed=2 * R * L * itemsize,  # read x + write out (pure HBM-bound kernel)
    )

    out2 = pl.pallas_call(
        kernel,
        out_shape=jax.ShapeDtypeStruct((R, L), x.dtype),
        grid_spec=pltpu.PrefetchScalarGridSpec(
            num_scalar_prefetch=0,
            grid=grid,
            in_specs=[pl.BlockSpec((tile_r, l_pad), lambda i: (i, 0))],
            out_specs=pl.BlockSpec((tile_r, l_pad), lambda i: (i, 0)),
        ),
        compiler_params=pltpu.CompilerParams(
            dimension_semantics=("parallel",),
            vmem_limit_bytes=32 * 1024 * 1024,
        ),
        cost_estimate=cost,
    )(x2)
    return out2.reshape(N, C, L)


if __name__ == "__main__":
    key = jax.random.PRNGKey(0)
    k0, k1 = jax.random.split(key)

    # Primary small case consistent with the module: (batch=2, channels=4, length=16).
    N, C, L = 2, 4, 16
    x = jax.random.normal(k0, (N, C, L), dtype=jnp.float32)
    out = jax.block_until_ready(softmax_log_probability_1d(x))
    ref = jax.nn.log_softmax(x, axis=-1)
    assert out.shape == (N, C, L)
    assert jnp.allclose(out, ref, atol=1e-5, rtol=1e-5), "mismatch vs reference (2,4,16)"

    # Second small case: non-multiple-of-8 row count and non-multiple-of-128 length,
    # exercising the in-kernel lane masking and row-overhang handling.
    N2, C2, L2 = 3, 5, 40
    x2 = jax.random.normal(k1, (N2, C2, L2), dtype=jnp.float32)
    out2 = jax.block_until_ready(softmax_log_probability_1d(x2))
    ref2 = jax.nn.log_softmax(x2, axis=-1)
    assert jnp.allclose(out2, ref2, atol=1e-5, rtol=1e-5), "mismatch vs reference (3,5,40)"

    print("KERNEL_OK")
</pallas_src>

<mosaic_0001>
module attributes {stable_mosaic.version = 11 : i64} {
  func.func @_log_softmax_kernel(%arg0: i32, %arg1: memref<8x128xf32, #tpu.memory_space<vmem>>, %arg2: memref<8x128xf32, #tpu.memory_space<vmem>>) attributes {dimension_semantics = [#tpu.dimension_semantics<parallel>], iteration_bounds = array<i64: 1>, scalar_prefetch = 0 : i64, scratch_operands = 0 : i64, tpu.core_type = #tpu.core_type<tc>, window_params = [{transform_indices = @transform_0, window_bounds = array<i64: 8, 128>}, {transform_indices = @transform_1, window_bounds = array<i64: 8, 128>}]} {
    %c0 = arith.constant 0 : index
    %c0_0 = arith.constant 0 : index
    %0 = vector.load %arg1[%c0, %c0_0] : memref<8x128xf32, #tpu.memory_space<vmem>>, vector<8x128xf32>
    %1 = tpu.iota {dimensions = array<i32: 1>} : vector<8x128xi32>
    %c16_i32 = arith.constant 16 : i32
    %2 = vector.broadcast %c16_i32 : i32 to vector<8x128xi32>
    %3 = arith.cmpi slt, %1, %2 : vector<8x128xi32>
    %cst = arith.constant 0xFF800000 : f32
    %4 = vector.broadcast %cst : f32 to vector<8x128xf32>
    %5 = arith.select %3, %0, %4 : vector<8x128xi1>, vector<8x128xf32>
    %cst_1 = arith.constant dense<0xFF800000> : vector<8xf32>
    %6 = vector.multi_reduction <maximumf>, %5, %cst_1 [1] : vector<8x128xf32> to vector<8xf32>
    %7 = vector.shape_cast %6 : vector<8xf32> to vector<8x1xf32>
    %8 = vector.broadcast %7 : vector<8x1xf32> to vector<8x128xf32>
    %9 = arith.subf %5, %8 : vector<8x128xf32>
    %10 = math.exp %9 : vector<8x128xf32>
    %cst_2 = arith.constant dense<0.000000e+00> : vector<8xf32>
    %11 = vector.multi_reduction <add>, %10, %cst_2 [1] : vector<8x128xf32> to vector<8xf32>
    %12 = vector.shape_cast %11 : vector<8xf32> to vector<8x1xf32>
    %13 = math.log %12 : vector<8x1xf32>
    %14 = vector.broadcast %13 : vector<8x1xf32> to vector<8x128xf32>
    %15 = arith.subf %9, %14 : vector<8x128xf32>
    %c0_3 = arith.constant 0 : index
    %c0_4 = arith.constant 0 : index
    %16 = vector.load %arg2[%c0_3, %c0_4] : memref<8x128xf32, #tpu.memory_space<vmem>>, vector<8x128xf32>
    tpu.vector_store %arg2[%c0_3, %c0_4], %15 {strides = array<i32>} : memref<8x128xf32, #tpu.memory_space<vmem>>, vector<8x128xf32>,
    return
  }
  func.func @transform_0(%arg0: i32) -> (i32, i32) {
    %c0_i32 = arith.constant 0 : i32
    %c0_i32_0 = arith.constant 0 : i32
    return %arg0, %c0_i32 : i32, i32
  }
  func.func @transform_1(%arg0: i32) -> (i32, i32) {
    %c0_i32 = arith.constant 0 : i32
    %c0_i32_0 = arith.constant 0 : i32
    return %arg0, %c0_i32 : i32, i32
  }
}

</mosaic_0001>

<llo_original>
// kernel: tpu_custom_call.1
$region0: #{tpu_custom_call.1}
  #allocation0 [shape = 'u32[]', space=smem, size = 0x4, offset = 0x4, fixed_abs, tag = 'smem constant byte address 0x4 - core index']
  #allocation1 [shape = 'u32[144,128]{1,0:T(1,128)}', space=vmem, size = 0x12000, scoped, tag = 'internal scratch']
  %s0 = inlined_call_operand.hbm [shape: f32[8,16], index: 0, kind: input, shape index: {}]
  %s1 = inlined_call_operand.hbm [shape: f32[8,16], index: 1, kind: output, shape index: {}]
  %s2 = sld [smem:[#allocation0]]
  $region18: #{tpu_custom_call.1} parent=0
    _
  %s4 = ssub.s32 1, %s2
  %s5 = scalar_select 0, %s4, %s2
  $region1: #{tpu_custom_call.1} parent=0
    #allocation2 [shape = 'u8[4096]{0}', space=vmem, size = 0x1000, scoped, tag = 'input window, operand 0, single buffered']
    #allocation3 [shape = 's32[1]{0}', space=sflag, size = 0x4, scoped, tag = 'scoped memory for tpu_custom_call.1']
    #allocation4 [shape = 's32[1]{0}', space=sflag, size = 0x4, scoped, tag = 'scoped memory for tpu_custom_call.1']
    #allocation5 [shape = 'u8[4096]{0}', space=vmem, size = 0x1000, scoped, tag = 'output window, operand 0, single buffered']
    %6 = vsyncpa [#allocation3], 0
    %7 = vsyncpa [#allocation4], 0
    // Predicated region
    $region2: #{tpu_custom_call.1} parent=1 // pred_check
      _
    $region3: #{tpu_custom_call.1} parent=1 // pred_check_branch
      %9 = sbr.rel (0) target = $region5
    $region4: #{tpu_custom_call.1} parent=1 // pred_region
      %s11 = ssub.s32 128, 128
      %12 = vsyncadd [#allocation3], %s11
      %s14 = sshll.u32 [#allocation2], 4
      %s15 = int_to_ptr.vmem [resolvable:$true] %s14
      %17 = dma.hbm_to_vmem [thread:$0]  %s0, 128, %s15, [#allocation3]
    $region5: #{tpu_custom_call.1} parent=1 // pred_fallthru
      _
    // Predicated region
    $region6: #{tpu_custom_call.1} parent=1 // pred_check
      _
    $region7: #{tpu_custom_call.1} parent=1 // pred_check_branch
      %19 = sbr.rel (0) target = $region9
    $region8: #{tpu_custom_call.1} parent=1 // pred_region
      %20 = dma.done [#allocation3], 128
    $region9: #{tpu_custom_call.1} parent=1 // pred_fallthru
      _
    %v21 = vld [vmem:[#allocation2] sm:$0xff]
    %v22 = vlaneseq
    %v23 = vand.u32 %v22, 127
    %vm24 = vcmp.lt.s32.totalorder %v23, 16
    %v25 = vsel %vm24, %v21, -inf
    %26 = vmax.xlane.f32.xlu0 %v25
    %v27 = vpop.xlane.xlu0 %26
    %v28 = vsub.f32 %v25, %v27
    %v29 = vmul.f32 %v28, 1.442695
    %v30 = vpow.pop %v29
    %31 = vadd.xlane.f32.xlu0 %v30
    %v32 = vpop.xlane.xlu0 %31
    %v33 = vlog2.pop %v32
    %v34 = vmul.f32 %v33, 0.6931472
    %v35 = vsub.f32 %v28, %v34
    %36 = vst [vmem:[#allocation5] sm:$0xff] %v35
    // Predicated region
    $region10: #{tpu_custom_call.1} parent=1 // pred_check
      _
    $region11: #{tpu_custom_call.1} parent=1 // pred_check_branch
      %38 = sbr.rel (0) target = $region13
    $region12: #{tpu_custom_call.1} parent=1 // pred_region
      %s40 = ssub.s32 128, 128
      %41 = vsyncadd [#allocation4], %s40
      %s43 = sshll.u32 [#allocation5], 4
      %s44 = int_to_ptr.vmem [resolvable:$true] %s43
      %46 = dma.vmem_to_hbm [thread:$0]  %s44, 128, %s1, [#allocation4]
    $region13: #{tpu_custom_call.1} parent=1 // pred_fallthru
      _
    // Predicated region
    $region14: #{tpu_custom_call.1} parent=1 // pred_check
      _
    $region15: #{tpu_custom_call.1} parent=1 // pred_check_branch
      %48 = sbr.rel (0) target = $region17
    $region16: #{tpu_custom_call.1} parent=1 // pred_region
      %49 = dma.done [#allocation4], 128
    $region17: #{tpu_custom_call.1} parent=1 // pred_fallthru
      _
    %50 = vsyncpa [#allocation3], 1
    %51 = vsyncpa [#allocation4], 1

</llo_original>
